<compile_context>
chip_gen: v6e
topology: v6e:2x2x1
jax: 0.10.0
libtpu: 0.0.40
codegen_flags: <defaults>
</compile_context>

<pallas_src>
import functools

import jax
import jax.numpy as jnp
from jax.experimental import pallas as pl
from jax.experimental.pallas import tpu as pltpu


# -----------------------------------------------------------------------------
# Kernel 1: single-pass per-channel batch statistics (sum and sum of squares).
# Accumulates into VMEM-resident output blocks across the whole grid.
# -----------------------------------------------------------------------------
def _stats_kernel(x_ref, s1_ref, s2_ref, *, l_total):
    n = pl.program_id(0)
    t = pl.program_id(1)

    @pl.when((n == 0) & (t == 0))
    def _():
        s1_ref[...] = jnp.zeros_like(s1_ref)
        s2_ref[...] = jnp.zeros_like(s2_ref)

    x = x_ref[0].astype(jnp.float32)                       # (C_in, TL)
    tl = x.shape[-1]
    pos = t * tl + jax.lax.broadcasted_iota(jnp.int32, (1, tl), 1)
    x = jnp.where(pos < l_total, x, 0.0)                   # zero ragged-tail padding
    s1_ref[...] += jnp.sum(x, axis=1, keepdims=True)
    s2_ref[...] += jnp.sum(x * x, axis=1, keepdims=True)


# -----------------------------------------------------------------------------
# Kernel 2: fused BN(folded scale/shift) -> ReLU -> 1x1 conv (MXU) -> AvgPool(2,2).
#   scale/shift: (C_in, 1)  folded training-mode BatchNorm affine
#   w_ref:       (C_out, C_in)   conv weight with the 0.5 pooling factor folded in
#   p_ref:       (2T, T)         binary pair-sum matrix (VMEM resident)
#   x_ref:       (1, C_in, 2T)   contiguous input tile (native NCL layout)
#   o_ref:       (1, C_out, T)   pooled output tile
# -----------------------------------------------------------------------------
def _transition_kernel(scale_ref, shift_ref, w_ref, p_ref, x_ref, o_ref, *, l_total):
    t = pl.program_id(1)

    x = x_ref[0].astype(jnp.float32)                       # (C_in, 2T)
    two_t = x.shape[-1]

    # BatchNorm (pre-folded) + ReLU on the VPU.
    h = jnp.maximum(x * scale_ref[...] + shift_ref[...], 0.0)

    # Mask padded tail columns so undefined block padding never reaches the MXU
    # (NaN/Inf * 0 would otherwise poison valid output columns).
    pos = t * two_t + jax.lax.broadcasted_iota(jnp.int32, (1, two_t), 1)
    h = jnp.where(pos < l_total, h, 0.0)

    # 1x1 conv == channel matmul on the MXU (0.5 already folded into W).
    y = jnp.dot(w_ref[...], h, preferred_element_type=jnp.float32)       # (C_out, 2T)
    # AvgPool(2,2) as a small matmul against the resident pair-sum matrix.
    o_ref[0] = jnp.dot(y, p_ref[...], preferred_element_type=jnp.float32).astype(o_ref.dtype)


def _pick_tile(lp, c_in, c_out, budget_bytes=24 * 1024 * 1024):
    """Lane-dense pooled-tile size with a bounded VMEM working set (v7x-safe)."""
    t = 512  # ~85% of HBM roofline per the measured tile sweep; no need for bigger.
    while t > 128:
        working = (
            2 * c_in * (2 * t) * 4          # x block, double-buffered
            + 2 * (2 * t) * t * 4           # pooling matrix buffers
            + 2 * c_out * t * 4             # output block, double-buffered
            + (c_in + c_out) * (2 * t) * 4  # f32 temporaries (h, y)
        )
        if working <= budget_bytes:
            break
        t //= 2
    # Small problems: single full-extent tile (allowed: block dim == array dim).
    return lp if lp <= t else t


def blond_dense_transition(x, gamma, beta, weight, *, eps=1e-5):
    """x: (N, C_in, L) f32; weight: (C_out, C_in, 1); returns (N, C_out, L // 2)."""
    N, C_in, L = x.shape
    C_out = weight.shape[0]
    assert L % 2 == 0, "AvgPool1d(k=2, s=2) here assumes even length"
    Lp = L // 2

    x = x.astype(jnp.float32)

    T = _pick_tile(Lp, C_in, C_out)
    TL = 2 * T
    num_t = pl.cdiv(Lp, T)
    grid = (N, num_t)

    # --- Single-pass BatchNorm batch statistics (one HBM read of x). ---
    s1, s2 = pl.pallas_call(
        functools.partial(_stats_kernel, l_total=L),
        out_shape=(jax.ShapeDtypeStruct((C_in, 1), jnp.float32),
                   jax.ShapeDtypeStruct((C_in, 1), jnp.float32)),
        grid=grid,
        in_specs=[pl.BlockSpec((1, C_in, TL), lambda n, t: (n, 0, t))],
        out_specs=(pl.BlockSpec((C_in, 1), lambda n, t: (0, 0)),
                   pl.BlockSpec((C_in, 1), lambda n, t: (0, 0))),
        compiler_params=pltpu.CompilerParams(
            dimension_semantics=("arbitrary", "arbitrary"),  # resident accumulators
            vmem_limit_bytes=40 * 1024 * 1024,
        ),
    )(x)

    count = jnp.float32(N * L)
    mean = s1 / count                                        # (C_in, 1)
    # Biased variance (matches training-mode BN normalization); f32 accumulation,
    # clamp guards against E[x^2]-mean^2 cancellation for large-mean activations.
    var = jnp.maximum(s2 / count - mean * mean, 0.0)
    scale = gamma.astype(jnp.float32).reshape(C_in, 1) * jax.lax.rsqrt(var + eps)
    shift = beta.astype(jnp.float32).reshape(C_in, 1) - mean * scale

    # 0.5 pooling factor folded into the conv weight; P is a binary pair-sum matrix.
    w2 = 0.5 * weight.reshape(C_out, C_in).astype(jnp.float32)
    rows = jnp.arange(TL, dtype=jnp.int32)
    cols = jnp.arange(T, dtype=jnp.int32)
    pool_mat = (rows[:, None] // 2 == cols[None, :]).astype(jnp.float32)  # (2T, T)

    out = pl.pallas_call(
        functools.partial(_transition_kernel, l_total=L),
        out_shape=jax.ShapeDtypeStruct((N, C_out, Lp), jnp.float32),
        grid=grid,
        in_specs=[
            pl.BlockSpec((C_in, 1), lambda n, t: (0, 0)),        # scale (resident)
            pl.BlockSpec((C_in, 1), lambda n, t: (0, 0)),        # shift (resident)
            pl.BlockSpec((C_out, C_in), lambda n, t: (0, 0)),    # conv weight (resident)
            pl.BlockSpec((TL, T), lambda n, t: (0, 0)),          # pooling matrix (resident)
            pl.BlockSpec((1, C_in, TL), lambda n, t: (n, 0, t)),  # x tile (streamed)
        ],
        out_specs=pl.BlockSpec((1, C_out, T), lambda n, t: (n, 0, t)),
        compiler_params=pltpu.CompilerParams(
            dimension_semantics=("parallel", "parallel"),
            vmem_limit_bytes=40 * 1024 * 1024,
        ),
    )(scale, shift, w2, pool_mat, x)

    return out  # (N, C_out, L // 2), PyTorch NCL layout


def _reference(x, gamma, beta, weight, eps=1e-5):
    # Pure-JAX reference of the PyTorch forward (training-mode BN).
    mean = jnp.mean(x, axis=(0, 2), keepdims=True)
    var = jnp.mean((x - mean) ** 2, axis=(0, 2), keepdims=True)  # biased
    h = (x - mean) / jnp.sqrt(var + eps)
    h = h * gamma.reshape(1, -1, 1) + beta.reshape(1, -1, 1)
    h = jnp.maximum(h, 0.0)
    w = weight.reshape(weight.shape[0], weight.shape[1])
    y = jnp.einsum('oc,ncl->nol', w, h)
    N, Co, L = y.shape
    return y.reshape(N, Co, L // 2, 2).mean(axis=-1)


if __name__ == "__main__":
    # Small shapes consistent with the module: batch=2, in_features=8, out_features=4, L=32.
    N, C_in, C_out, L = 2, 8, 4, 32
    key = jax.random.PRNGKey(0)
    kx, kg, kb, kw = jax.random.split(key, 4)

    x = jax.random.normal(kx, (N, C_in, L), dtype=jnp.float32)
    gamma = 1.0 + 0.1 * jax.random.normal(kg, (C_in,), dtype=jnp.float32)
    beta = 0.1 * jax.random.normal(kb, (C_in,), dtype=jnp.float32)
    weight = 0.1 * jax.random.normal(kw, (C_out, C_in, 1), dtype=jnp.float32)

    out = blond_dense_transition(x, gamma, beta, weight)
    out = jax.block_until_ready(out)

    ref = _reference(x, gamma, beta, weight)
    assert out.shape == (N, C_out, L // 2), out.shape
    assert jnp.allclose(out, ref, rtol=1e-4, atol=1e-4), float(jnp.max(jnp.abs(out - ref)))

    print("KERNEL_OK")
</pallas_src>

<mosaic_0001>
module attributes {stable_mosaic.version = 11 : i64} {
  func.func @_stats_kernel(%arg0: i32, %arg1: i32, %arg2: memref<1x8x32xf32, #tpu.memory_space<vmem>>, %arg3: memref<8x1xf32, #tpu.memory_space<vmem>>, %arg4: memref<8x1xf32, #tpu.memory_space<vmem>>) attributes {dimension_semantics = [#tpu.dimension_semantics<arbitrary>, #tpu.dimension_semantics<arbitrary>], iteration_bounds = array<i64: 2, 1>, scalar_prefetch = 0 : i64, scratch_operands = 0 : i64, tpu.core_type = #tpu.core_type<tc>, window_params = [{transform_indices = @transform_0, window_bounds = array<i64: 1, 8, 32>}, {pipeline_mode = #tpu.pipeline_mode<synchronous>, transform_indices = @transform_1, window_bounds = array<i64: 8, 1>}, {pipeline_mode = #tpu.pipeline_mode<synchronous>, transform_indices = @transform_2, window_bounds = array<i64: 8, 1>}]} {
    %c0_i32 = arith.constant 0 : i32
    %0 = arith.cmpi eq, %arg0, %c0_i32 : i32
    %c0_i32_0 = arith.constant 0 : i32
    %1 = arith.cmpi eq, %arg1, %c0_i32_0 : i32
    %2 = arith.andi %0, %1 : i1
    %3 = arith.extui %2 : i1 to i32
    %c0_i32_1 = arith.constant 0 : i32
    %4 = arith.cmpi ne, %3, %c0_i32_1 : i32
    scf.if %4 {
      %cst_15 = arith.constant 0.000000e+00 : f32
      %28 = vector.broadcast %cst_15 : f32 to vector<8x1xf32>
      %c0_16 = arith.constant 0 : index
      %c0_17 = arith.constant 0 : index
      %29 = vector.load %arg3[%c0_16, %c0_17] : memref<8x1xf32, #tpu.memory_space<vmem>>, vector<8x1xf32>
      tpu.vector_store %arg3[%c0_16, %c0_17], %28 {strides = array<i32>} : memref<8x1xf32, #tpu.memory_space<vmem>>, vector<8x1xf32>,
      %cst_18 = arith.constant 0.000000e+00 : f32
      %30 = vector.broadcast %cst_18 : f32 to vector<8x1xf32>
      %c0_19 = arith.constant 0 : index
      %c0_20 = arith.constant 0 : index
      %31 = vector.load %arg4[%c0_19, %c0_20] : memref<8x1xf32, #tpu.memory_space<vmem>>, vector<8x1xf32>
      tpu.vector_store %arg4[%c0_19, %c0_20], %30 {strides = array<i32>} : memref<8x1xf32, #tpu.memory_space<vmem>>, vector<8x1xf32>,
    } else {
    }
    %c0 = arith.constant 0 : index
    %c0_2 = arith.constant 0 : index
    %c0_3 = arith.constant 0 : index
    %5 = vector.load %arg2[%c0, %c0_2, %c0_3] : memref<1x8x32xf32, #tpu.memory_space<vmem>>, vector<1x8x32xf32>
    %6 = vector.shape_cast %5 : vector<1x8x32xf32> to vector<8x32xf32>
    %c32_i32 = arith.constant 32 : i32
    %7 = arith.muli %arg1, %c32_i32 : i32
    %8 = tpu.iota {dimensions = array<i32: 1>} : vector<1x32xi32>
    %9 = vector.broadcast %7 : i32 to vector<1x32xi32>
    %10 = arith.addi %9, %8 : vector<1x32xi32>
    %c32_i32_4 = arith.constant 32 : i32
    %11 = vector.broadcast %c32_i32_4 : i32 to vector<1x32xi32>
    %12 = arith.cmpi slt, %10, %11 : vector<1x32xi32>
    %cst = arith.constant 0.000000e+00 : f32
    %13 = vector.shape_cast %12 : vector<1x32xi1> to vector<1x32xi1>
    %14 = vector.broadcast %13 : vector<1x32xi1> to vector<8x32xi1>
    %15 = vector.broadcast %cst : f32 to vector<8x32xf32>
    %16 = arith.select %14, %6, %15 : vector<8x32xi1>, vector<8x32xf32>
    %c0_5 = arith.constant 0 : index
    %c0_6 = arith.constant 0 : index
    %17 = vector.load %arg3[%c0_5, %c0_6] : memref<8x1xf32, #tpu.memory_space<vmem>>, vector<8x1xf32>
    %cst_7 = arith.constant dense<0.000000e+00> : vector<8xf32>
    %18 = vector.multi_reduction <add>, %16, %cst_7 [1] : vector<8x32xf32> to vector<8xf32>
    %19 = vector.shape_cast %18 : vector<8xf32> to vector<8x1xf32>
    %20 = arith.addf %17, %19 : vector<8x1xf32>
    %c0_8 = arith.constant 0 : index
    %c0_9 = arith.constant 0 : index
    %21 = vector.load %arg3[%c0_8, %c0_9] : memref<8x1xf32, #tpu.memory_space<vmem>>, vector<8x1xf32>
    tpu.vector_store %arg3[%c0_8, %c0_9], %20 {strides = array<i32>} : memref<8x1xf32, #tpu.memory_space<vmem>>, vector<8x1xf32>,
    %c0_10 = arith.constant 0 : index
    %c0_11 = arith.constant 0 : index
    %22 = vector.load %arg4[%c0_10, %c0_11] : memref<8x1xf32, #tpu.memory_space<vmem>>, vector<8x1xf32>
    %23 = arith.mulf %16, %16 : vector<8x32xf32>
    %cst_12 = arith.constant dense<0.000000e+00> : vector<8xf32>
    %24 = vector.multi_reduction <add>, %23, %cst_12 [1] : vector<8x32xf32> to vector<8xf32>
    %25 = vector.shape_cast %24 : vector<8xf32> to vector<8x1xf32>
    %26 = arith.addf %22, %25 : vector<8x1xf32>
    %c0_13 = arith.constant 0 : index
    %c0_14 = arith.constant 0 : index
    %27 = vector.load %arg4[%c0_13, %c0_14] : memref<8x1xf32, #tpu.memory_space<vmem>>, vector<8x1xf32>
    tpu.vector_store %arg4[%c0_13, %c0_14], %26 {strides = array<i32>} : memref<8x1xf32, #tpu.memory_space<vmem>>, vector<8x1xf32>,
    return
  }
  func.func @transform_0(%arg0: i32, %arg1: i32) -> (i32, i32, i32) {
    %c0_i32 = arith.constant 0 : i32
    %c0_i32_0 = arith.constant 0 : i32
    return %arg0, %c0_i32, %arg1 : i32, i32, i32
  }
  func.func @transform_1(%arg0: i32, %arg1: i32) -> (i32, i32) {
    %c0_i32 = arith.constant 0 : i32
    %c0_i32_0 = arith.constant 0 : i32
    %c0_i32_1 = arith.constant 0 : i32
    return %c0_i32, %c0_i32_0 : i32, i32
  }
  func.func @transform_2(%arg0: i32, %arg1: i32) -> (i32, i32) {
    %c0_i32 = arith.constant 0 : i32
    %c0_i32_0 = arith.constant 0 : i32
    %c0_i32_1 = arith.constant 0 : i32
    return %c0_i32, %c0_i32_0 : i32, i32
  }
}

</mosaic_0001>

<llo_original>
// kernel: tpu_custom_call.1
$region0: #{tpu_custom_call.1}
  #allocation0 [shape = 'u32[]', space=smem, size = 0x4, offset = 0x4, fixed_abs, tag = 'smem constant byte address 0x4 - core index']
  #allocation1 [shape = 'u32[144,128]{1,0:T(1,128)}', space=vmem, size = 0x12000, scoped, tag = 'internal scratch']
  %s0 = inlined_call_operand.hbm [shape: f32[2,8,32], index: 0, kind: input, shape index: {}]
  %s1 = inlined_call_operand.vmem [shape: f32[8,1], index: 1, kind: output, shape index: {0}]
  %s2 = inlined_call_operand.vmem [shape: f32[8,1], index: 2, kind: output, shape index: {1}]
  %3 = xla_tuple %s1, %s2
  %s4 = sld [smem:[#allocation0]]
  $region53: #{tpu_custom_call.1} parent=0
    _
  %s6 = ssub.s32 1, %s4
  %s7 = scalar_select 0, %s6, %s4
  $region1: #{tpu_custom_call.1} parent=0
    #allocation2 [shape = 'u8[8192]{0}', space=vmem, size = 0x2000, scoped, tag = 'input window, operand 0']
    #allocation3 [shape = 's32[2]{0}', space=sflag, size = 0x8, scoped, tag = 'scoped memory for tpu_custom_call.1']
    %8 = vsyncpa [#allocation3], 0
    %s9 = scalar_lea.sflag [#allocation3], 1
    %10 = vsyncpa %s9, 0
    loop: start=0, step=1, limit=4
    $region2: #{tpu_custom_call.1} parent=1 // loop_pre_header
      _
    $region3: #{tpu_custom_call.1} parent=1 // loop_header
      %s12 = sphi 0, %s16
      %p13 = scmp.ge.s32.totalorder %s12, 4
      %s19 = sphi 0, %s31
      %s20 = sphi 0, %s27
      %s21 = sphi 0, %s19
      %s22 = sphi 0, %s20
      %s23 = sphi 0, %s21
      %s24 = sphi 0, %s22
      %s36 = sphi 0, %s38
      %s39 = sphi 0, %s36
      %s40 = sphi 0, %s39
      %s56 = sphi 0, %s40
      %s60 = sphi 0, %s60
      %s62 = sphi 0, %s60
      %s63 = sphi 0, %s62
      %s77 = sphi 0, %s63
      %s81 = sphi 0, %s81
      %s83 = sphi 0, %s81
      %s84 = sphi 0, %s83
      %s98 = sphi 0, %s84
    $region4: #{tpu_custom_call.1} parent=1 // loop_header_branch
      %15 = sbr.rel (%p13) target = $region8
    $region5: #{tpu_custom_call.1} parent=1 // loop_body
      %s17 = ssub.s32 %s12, 1
      %s18 = ssub.s32 %s12, 2
      %s25 = sadd.s32 1, %s20
      %p26 = scmp.ge.s32.totalorder %s25, 1
      %s27 = scalar_select %p26, 0, %s25
      %s28 = sadd.s32 1, %s19
      %s29 = scalar_select %p26, %s28, %s19
      %p30 = scmp.ge.s32.totalorder %s29, 2
      %s31 = scalar_select %p30, 0, %s29
      %s32 = ssub.s32 %s19, %s31
      %s33 = ssub.s32 %s20, %s27
      %s34 = sor.u32 %s32, %s33
      %p35 = scmp.eq.s32.totalorder %s34, 0
      %s37 = sadd.s32 %s36, 1
      %s38 = scalar_select %p35, %s36, %s37
      %p41 = pneg %p35
      %p42 = scmp.eq.s32.totalorder %s12, 1
      %p43 = por %p41, %p42
      %p44 = scmp.ne.s32.totalorder %s36, %s39
      %p45 = scmp.eq.s32.totalorder %s12, 0
      %p46 = por %p44, %p45
      %p47 = scmp.ne.s32.totalorder %s36, %s39
      %p48 = scmp.eq.s32.totalorder %s17, 1
      %p49 = por %p47, %p48
      %p50 = scmp.ne.s32.totalorder %s39, %s40
      %p51 = scmp.eq.s32.totalorder %s17, 0
      %p52 = por %p50, %p51
      %p53 = scmp.ne.s32.totalorder %s39, %s40
      %p54 = scmp.eq.s32.totalorder %s18, 1
      %p55 = por %p53, %p54
      %p57 = scmp.ne.s32.totalorder %s40, %s56
      %p58 = scmp.eq.s32.totalorder %s18, 0
      %p59 = por %p57, %p58
      %s61 = sadd.s32 %s60, 1
      %p64 = scmp.eq.s32.totalorder %s12, 1
      %p65 = scmp.ne.s32.totalorder %s60, %s62
      %p66 = scmp.eq.s32.totalorder %s12, 0
      %p67 = por %p65, %p66
      %p68 = scmp.ne.s32.totalorder %s60, %s62
      %p69 = scmp.eq.s32.totalorder %s17, 1
      %p70 = por %p68, %p69
      %p71 = scmp.ne.s32.totalorder %s62, %s63
      %p72 = scmp.eq.s32.totalorder %s17, 0
      %p73 = por %p71, %p72
      %p74 = scmp.ne.s32.totalorder %s62, %s63
      %p75 = scmp.eq.s32.totalorder %s18, 1
      %p76 = por %p74, %p75
      %p78 = scmp.ne.s32.totalorder %s63, %s77
      %p79 = scmp.eq.s32.totalorder %s18, 0
      %p80 = por %p78, %p79
      %s82 = sadd.s32 %s81, 1
      %p85 = scmp.eq.s32.totalorder %s12, 1
      %p86 = scmp.ne.s32.totalorder %s81, %s83
      %p87 = scmp.eq.s32.totalorder %s12, 0
      %p88 = por %p86, %p87
      %p89 = scmp.ne.s32.totalorder %s81, %s83
      %p90 = scmp.eq.s32.totalorder %s17, 1
      %p91 = por %p89, %p90
      %p92 = scmp.ne.s32.totalorder %s83, %s84
      %p93 = scmp.eq.s32.totalorder %s17, 0
      %p94 = por %p92, %p93
      %p95 = scmp.ne.s32.totalorder %s83, %s84
      %p96 = scmp.eq.s32.totalorder %s18, 1
      %p97 = por %p95, %p96
      %p99 = scmp.ne.s32.totalorder %s84, %s98
      %p100 = scmp.eq.s32.totalorder %s18, 0
      %p101 = por %p99, %p100
      %p102 = scmp.le.s32.totalorder 1, %s12
      %p103 = scmp.lt.s32.totalorder %s12, 3
      %p104 = pnand %p102, %p103
      %p105 = pneg %p104
      // Predicated region
      $region9: #{tpu_custom_call.1} parent=5 // pred_check
        _
      $region10: #{tpu_custom_call.1} parent=5 // pred_check_branch
        %107 = sbr.rel (%p104) target = $region12
      $region11: #{tpu_custom_call.1} parent=5 // pred_region
        %s108 = ssub.s32 %s12, 1
      $region12: #{tpu_custom_call.1} parent=5 // pred_fallthru
        _
      %p109 = scmp.lt.s32.totalorder %s12, 2
      // Predicated region
      $region13: #{tpu_custom_call.1} parent=5 // pred_check
        %p110 = pneg %p109
      $region14: #{tpu_custom_call.1} parent=5 // pred_check_branch
        %112 = sbr.rel (%p110) target = $region16
      $region15: #{tpu_custom_call.1} parent=5 // pred_region
        // Predicated region
        $region17: #{tpu_custom_call.1} parent=15 // pred_check
          %p113 = pneg %p46
        $region18: #{tpu_custom_call.1} parent=15 // pred_check_branch
          %115 = sbr.rel (%p113) target = $region20
        $region19: #{tpu_custom_call.1} parent=15 // pred_region
          %s116 = sand.u32 %s36, 1
          %s117 = scalar_lea.sflag [#allocation3], %s116
          %s118 = sand.u32 %s36, 1
          %s119 = smul.addr %s118, 8
          %s120 = scalar_lea.vmem [#allocation2], %s119
          %s122 = ssub.s32 128, 128
          %123 = vsyncadd %s117, %s122
          %s124 = sadd.s32 %s20, %s19
          %s125 = smul.addr %s124, 128
          %s126 = scalar_lea.hbm %s0, %s125
          %s128 = sshll.u32 %s120, 4
          %s129 = int_to_ptr.vmem [resolvable:$true] %s128
          %131 = dma.hbm_to_vmem [thread:$0]  %s126, 128, %s129, %s117
        $region20: #{tpu_custom_call.1} parent=15 // pred_fallthru
          _
      $region16: #{tpu_custom_call.1} parent=5 // pred_fallthru
        _
      %p132 = scmp.le.s32.totalorder 1, %s12
      %p133 = scmp.lt.s32.totalorder %s12, 3
      %p134 = pnand %p132, %p133
      %p135 = pneg %p134
      // Predicated region
      $region21: #{tpu_custom_call.1} parent=5 // pred_check
        _
      $region22: #{tpu_custom_call.1} parent=5 // pred_check_branch
        %137 = sbr.rel (%p134) target = $region24
      $region23: #{tpu_custom_call.1} parent=5 // pred_region
        %s138 = ssub.s32 %s12, 1
        %s139 = sand.u32 %s39, 1
        %s140 = scalar_lea.sflag [#allocation3], %s139
        %s141 = sand.u32 %s39, 1
        %s142 = smul.addr %s141, 8
        %s143 = scalar_lea.vmem [#allocation2], %s142
        // Predicated region
        $region25: #{tpu_custom_call.1} parent=23 // pred_check
          %p144 = pneg %p52
        $region26: #{tpu_custom_call.1} parent=23 // pred_check_branch
          %146 = sbr.rel (%p144) target = $region28
        $region27: #{tpu_custom_call.1} parent=23 // pred_region
          %147 = dma.done %s140, 128
        $region28: #{tpu_custom_call.1} parent=23 // pred_fallthru
          _
        %s148 = sand.u32 %s39, 1
        %s149 = scalar_lea.sflag [#allocation3], %s148
        %s150 = sand.u32 %s39, 1
        %s151 = smul.addr %s150, 8
        %s152 = scalar_lea.vmem [#allocation2], %s151
        %p153 = pneg %p52
        %p154 = pneg %p49
        %p155 = pneg %p73
        %p156 = pneg %p70
        %p157 = pneg %p94
        %p158 = pneg %p91
        %p159 = scmp.eq.s32.totalorder %s21, 0
        %p160 = scmp.eq.s32.totalorder %s22, 0
        %p161 = pnand %p159, %p160
        %p162 = pneg %p161
        // Predicated region
        $region29: #{tpu_custom_call.1} parent=23 // pred_check
          _
        $region30: #{tpu_custom_call.1} parent=23 // pred_check_branch
          %164 = sbr.rel (%p161) target = $region32
        $region31: #{tpu_custom_call.1} parent=23 // pred_region
          %vm165 = vcmask 7168
          %166 = vst.msk [vmem:[%s1] sm:$0xff] %vm165, 0.0
          %167 = vst.msk [vmem:[%s2] sm:$0xff] %vm165, 0.0
        $region32: #{tpu_custom_call.1} parent=23 // pred_fallthru
          _
        %v168 = vld [vmem:[%s143] sm:$0xff]
        %s169 = smul.u32 %s22, 32
        %v170 = vlaneseq
        %v171 = vand.u32 %v170, 127
        %v172 = vstv %s169
        %v173 = vadd.s32 %v172, %v171
        %vm174 = vcmp.lt.s32.totalorder %v173, 32
        %v175 = vsel %vm174, 1, 0
        %vm176 = vcmp.eq.s32.totalorder %v175, 1
        %v177 = vsel %vm176, %v168, 0.0
        %v178 = vld [vmem:[%s1] sm:$0xff]
        %vm179 = vcmask 261120
        %v180 = vsel %vm179, %v177, 0.0
        %181 = vadd.xlane.f32.xlu0 %v180
        %v182 = vpop.xlane.xlu0 %181
        %v183 = vadd.f32 %v178, %v182
        %vm184 = vcmask 7168
        %185 = vst.msk [vmem:[%s1] sm:$0xff] %vm184, %v183
        %v186 = vld [vmem:[%s2] sm:$0xff]
        %v187 = vmul.f32 %v177, %v177
        %v188 = vsel %vm179, %v187, 0.0
        %189 = vadd.xlane.f32.xlu0 %v188
        %v190 = vpop.xlane.xlu0 %189
        %v191 = vadd.f32 %v186, %v190
        %192 = vst.msk [vmem:[%s2] sm:$0xff] %vm184, %v191
        // Predicated region
        $region33: #{tpu_custom_call.1} parent=23 // pred_check
          %p193 = pneg %p70
        $region34: #{tpu_custom_call.1} parent=23 // pred_check_branch
          %195 = sbr.rel (%p193) target = $region36
        $region35: #{tpu_custom_call.1} parent=23 // pred_region
          _
        $region36: #{tpu_custom_call.1} parent=23 // pred_fallthru
          _
        // Predicated region
        $region37: #{tpu_custom_call.1} parent=23 // pred_check
          %p196 = pneg %p91
        $region38: #{tpu_custom_call.1} parent=23 // pred_check_branch
          %198 = sbr.rel (%p196) target = $region40
        $region39: #{tpu_custom_call.1} parent=23 // pred_region
          _
        $region40: #{tpu_custom_call.1} parent=23 // pred_fallthru
          _
        // Predicated region
        $region41: #{tpu_custom_call.1} parent=23 // pred_check
          %p199 = pneg %p70
        $region42: #{tpu_custom_call.1} parent=23 // pred_check_branch
          %201 = sbr.rel (%p199) target = $region44
        $region43: #{tpu_custom_call.1} parent=23 // pred_region
          _
        $region44: #{tpu_custom_call.1} parent=23 // pred_fallthru
          _
        // Predicated region
        $region45: #{tpu_custom_call.1} parent=23 // pred_check
          %p202 = pneg %p91
        $region46: #{tpu_custom_call.1} parent=23 // pred_check_branch
          %204 = sbr.rel (%p202) target = $region48
        $region47: #{tpu_custom_call.1} parent=23 // pred_region
          _
        $region48: #{tpu_custom_call.1} parent=23 // pred_fallthru
          _
      $region24: #{tpu_custom_call.1} parent=5 // pred_fallthru
        _
      %p205 = scmp.le.s32.totalorder 2, %s12
      // Predicated region
      $region49: #{tpu_custom_call.1} parent=5 // pred_check
        %p206 = pneg %p205
      $region50: #{tpu_custom_call.1} parent=5 // pred_check_branch
        %208 = sbr.rel (%p206) target = $region52
      $region51: #{tpu_custom_call.1} parent=5 // pred_region
        %s209 = ssub.s32 %s12, 2
      $region52: #{tpu_custom_call.1} parent=5 // pred_fallthru
        _
    $region6: #{tpu_custom_call.1} parent=1 // loop_footer
      %s16 = sadd.s32 1, %s12
    $region7: #{tpu_custom_call.1} parent=1 // loop_footer_branch
      %11 = sbr.rel target = $region3
    $region8: #{tpu_custom_call.1} parent=1 // loop_exit
      _
    %210 = vsyncpa [#allocation3], 1
    %s211 = scalar_lea.sflag [#allocation3], 1
    %212 = vsyncpa %s211, 1

</llo_original>
